<compile_context>
chip_gen: v7x
topology: tpu7x:2x2x1
jax: 0.10.0
libtpu: 0.0.40
codegen_flags: <defaults>
</compile_context>

<pallas_src>
import functools

import numpy as np
import jax
import jax.numpy as jnp
from jax.experimental import pallas as pl
from jax.experimental.pallas import tpu as pltpu

F_PAD = 128  # lane-aligned hidden width (multiple of 128)


# ---------------------------------------------------------------------------
# Kernels
# ---------------------------------------------------------------------------
def _make_leaf_kernel(f_pad):
    def kernel(x_ref, wiou_ref, biou_ref, h_ref, c_ref):
        iou = (jnp.dot(x_ref[...], wiou_ref[...],
                       preferred_element_type=jnp.float32) + biou_ref[...])
        i = jax.nn.sigmoid(iou[:, 0:f_pad])
        o = jax.nn.sigmoid(iou[:, f_pad:2 * f_pad])
        u = jnp.tanh(iou[:, 2 * f_pad:3 * f_pad])
        c = i * u
        h_ref[...] = (o * jnp.tanh(c)).astype(h_ref.dtype)
        c_ref[...] = c
    return kernel


def _make_internal_kernel(f_pad, max_ch):
    def kernel(xp_ref, chh_ref, chc_ref, wcomb_ref, bcomb_ref, uf_ref,
               h_ref, c_ref, lhs_ref):
        chh = chh_ref[...]                              # (max_ch, tile, f_pad) bf16
        tile = chh.shape[1]

        # Per-parent segment sum of child hidden states.  Padded child slots
        # were gathered from the dedicated zero row, so a plain sum is exact.
        h_sum = jnp.sum(chh.astype(jnp.float32), axis=0)

        # One fused K=256 MXU pass computes every parent-side gate term:
        #   [iou | xwf] = [x_parent | h_sum] @ [[W_iou^T  W_f^T],
        #                                       [U_iou^T     0 ]] + [b_iou | b_f]
        lhs_ref[:, 0:f_pad] = xp_ref[...]
        lhs_ref[:, f_pad:2 * f_pad] = h_sum.astype(jnp.bfloat16)
        gates = (jnp.dot(lhs_ref[...], wcomb_ref[...],
                         preferred_element_type=jnp.float32) + bcomb_ref[...])
        i = jax.nn.sigmoid(gates[:, 0:f_pad])
        o = jax.nn.sigmoid(gates[:, f_pad:2 * f_pad])
        u = jnp.tanh(gates[:, 2 * f_pad:3 * f_pad])
        xwf = gates[:, 3 * f_pad:4 * f_pad]             # W_f(x_parent) + b_f

        # Batched forget-gate matmul: one (max_ch*tile, f_pad) x (f_pad, f_pad)
        # MXU op instead of max_ch separate small matmuls.
        fh = jnp.dot(chh.reshape(max_ch * tile, f_pad), uf_ref[...],
                     preferred_element_type=jnp.float32)
        f = jax.nn.sigmoid(xwf[None, :, :] + fh.reshape(max_ch, tile, f_pad))
        # Padded child slots have chc == 0, so they contribute nothing.
        c_sum = jnp.sum(f * chc_ref[...].astype(jnp.float32), axis=0)

        c = i * u + c_sum
        h_ref[...] = (o * jnp.tanh(c)).astype(h_ref.dtype)
        c_ref[...] = c
    return kernel


# ---------------------------------------------------------------------------
# pallas_call wrappers (jitted so each bucketed shape compiles once)
# ---------------------------------------------------------------------------
@functools.partial(jax.jit, static_argnames=("tile",))
def _leaf_call(x, w_iou, b_iou, *, tile):
    p_pad, f_pad = x.shape
    kernel = _make_leaf_kernel(f_pad)
    return pl.pallas_call(
        kernel,
        out_shape=(jax.ShapeDtypeStruct((p_pad, f_pad), jnp.bfloat16),
                   jax.ShapeDtypeStruct((p_pad, f_pad), jnp.float32)),
        grid=(p_pad // tile,),
        in_specs=[
            pl.BlockSpec((tile, f_pad), lambda i: (i, 0)),
            pl.BlockSpec((f_pad, 3 * f_pad), lambda i: (0, 0)),
            pl.BlockSpec((1, 3 * f_pad), lambda i: (0, 0)),
        ],
        out_specs=(pl.BlockSpec((tile, f_pad), lambda i: (i, 0)),
                   pl.BlockSpec((tile, f_pad), lambda i: (i, 0))),
        compiler_params=pltpu.CompilerParams(
            dimension_semantics=("parallel",)),
    )(x, w_iou, b_iou)


@functools.partial(jax.jit, static_argnames=("tile", "max_ch"))
def _internal_call(x_p, child_h, child_c, w_comb, b_comb, u_f, *, tile, max_ch):
    p_pad, f_pad = x_p.shape
    kernel = _make_internal_kernel(f_pad, max_ch)
    return pl.pallas_call(
        kernel,
        out_shape=(jax.ShapeDtypeStruct((p_pad, f_pad), jnp.bfloat16),
                   jax.ShapeDtypeStruct((p_pad, f_pad), jnp.float32)),
        grid=(p_pad // tile,),
        in_specs=[
            pl.BlockSpec((tile, f_pad), lambda i: (i, 0)),
            pl.BlockSpec((max_ch, tile, f_pad), lambda i: (0, i, 0)),
            pl.BlockSpec((max_ch, tile, f_pad), lambda i: (0, i, 0)),
            pl.BlockSpec((2 * f_pad, 4 * f_pad), lambda i: (0, 0)),
            pl.BlockSpec((1, 4 * f_pad), lambda i: (0, 0)),
            pl.BlockSpec((f_pad, f_pad), lambda i: (0, 0)),
        ],
        out_specs=(pl.BlockSpec((tile, f_pad), lambda i: (i, 0)),
                   pl.BlockSpec((tile, f_pad), lambda i: (i, 0))),
        scratch_shapes=[pltpu.VMEM((tile, 2 * f_pad), jnp.bfloat16)],
        compiler_params=pltpu.CompilerParams(
            dimension_semantics=("parallel",)),
    )(x_p, child_h, child_c, w_comb, b_comb, u_f)


# ---------------------------------------------------------------------------
# Host-side glue (level masks, children-major packing, scatter) — bucketed.
# ---------------------------------------------------------------------------
def _bucket_pow2(n, minimum):
    b = minimum
    while b < n:
        b *= 2
    return b


def _is_v7x():
    try:
        return "v7" in jax.devices()[0].device_kind.lower()
    except Exception:
        return False


def _pick_tile(p_pad, max_tile, max_ch, is_v7x):
    """Power-of-two tile that divides p_pad, fits VMEM, and feeds the megacore."""
    tile = min(p_pad, max_tile)
    # VMEM budget for the double-buffered child blocks (chh + chc, bf16 each):
    # bytes/parent-row = max_ch * F_PAD * (2 + 2) * 2 (double buffering).
    per_row = max(1, max_ch) * F_PAD * 4 * 2
    budget = 20 * 1024 * 1024  # conservative under v7x's 32 MiB scoped default
    while tile > 8 and tile * per_row > budget:
        tile //= 2
    # v7x megacore: ensure grid >= 2 so both TensorCores get a share.
    if is_v7x and tile == p_pad and p_pad >= 16:
        tile //= 2
    return tile


def tree_lstm_forward(params, features, node_order, adjacency_list, edge_order):
    """features: (N, F) float32. Returns h: (N, F) float32."""
    node_order = np.asarray(node_order)
    adjacency_list = np.asarray(adjacency_list)
    edge_order = np.asarray(edge_order)
    N, F = features.shape
    f_pad = F_PAD
    assert F <= f_pad

    # N+1 rows: row N is a dedicated zero row; every padded gather index points
    # at it, so padded parent/child slots are exactly zero with no masking pass.
    feat = jnp.zeros((N + 1, f_pad), jnp.bfloat16).at[:N, :F].set(
        features.astype(jnp.bfloat16))
    h = jnp.zeros((N + 1, f_pad), jnp.bfloat16)   # hidden state (matmul operand)
    c = jnp.zeros((N + 1, f_pad), jnp.float32)    # cell state kept in f32 on host

    is_v7x = _is_v7x()
    max_tile = 512 if is_v7x else 1024

    for n in range(int(node_order.max()) + 1):
        node_idx = np.where(node_order == n)[0]
        P = node_idx.shape[0]
        p_pad = _bucket_pow2(P, 8)

        parent_gather = np.full((p_pad,), N, np.int32)
        parent_gather[:P] = node_idx
        x_p = feat[parent_gather]

        if n == 0:
            tile = _pick_tile(p_pad, max_tile, 0, is_v7x)
            h_new, c_new = _leaf_call(x_p, params["W_iou_T"], params["b_iou"],
                                      tile=tile)
        else:
            edge_idx = np.where(edge_order == n)[0]
            adj = adjacency_list[edge_idx]
            # Children of each parent at this level (explicit matching, so it
            # does not depend on edge ordering like unique_consecutive does).
            children = [adj[adj[:, 0] == p, 1] for p in node_idx]
            max_ch = _bucket_pow2(max(len(cs) for cs in children), 1)

            # Children-major gather index; padded slots -> zero row N.
            child_gather = np.full((max_ch, p_pad), N, np.int32)
            for r, cs in enumerate(children):
                child_gather[:len(cs), r] = cs
            chh = h[child_gather]                              # (max_ch, p_pad, f_pad) bf16
            chc = c[child_gather].astype(jnp.bfloat16)         # bf16 halves the largest stream

            tile = _pick_tile(p_pad, max_tile, max_ch, is_v7x)
            h_new, c_new = _internal_call(
                x_p, chh, chc,
                params["W_comb_T"], params["b_comb"], params["U_f_T"],
                tile=tile, max_ch=max_ch)

        h = h.at[node_idx].set(h_new[:P])
        c = c.at[node_idx].set(c_new[:P])

    return h[:N, :F].astype(jnp.float32)


# ---------------------------------------------------------------------------
# Parameter init (nn.Linear-style) + lane-aligned padding/packing.
# ---------------------------------------------------------------------------
def init_params(key, F, f_pad=F_PAD):
    k = 1.0 / np.sqrt(F)
    ks = jax.random.split(key, 6)
    W_iou = jax.random.uniform(ks[0], (3 * F, F), jnp.float32, -k, k)
    b_iou = jax.random.uniform(ks[1], (3 * F,), jnp.float32, -k, k)
    U_iou = jax.random.uniform(ks[2], (3 * F, F), jnp.float32, -k, k)
    W_f = jax.random.uniform(ks[3], (F, F), jnp.float32, -k, k)
    b_f = jax.random.uniform(ks[4], (F,), jnp.float32, -k, k)
    U_f = jax.random.uniform(ks[5], (F, F), jnp.float32, -k, k)
    raw = dict(W_iou=W_iou, b_iou=b_iou, U_iou=U_iou, W_f=W_f, b_f=b_f, U_f=U_f)

    def pad_w(W, gates):   # torch (gates*F, F) -> transposed (f_pad, gates*f_pad)
        Wp = np.zeros((f_pad, gates * f_pad), np.float32)
        W = np.asarray(W)
        for g in range(gates):
            Wp[:F, g * f_pad:g * f_pad + F] = W[g * F:(g + 1) * F, :].T
        return Wp

    def pad_b(b, gates):
        bp = np.zeros((1, gates * f_pad), np.float32)
        b = np.asarray(b)
        for g in range(gates):
            bp[0, g * f_pad:g * f_pad + F] = b[g * F:(g + 1) * F]
        return bp

    W_iou_T = pad_w(W_iou, 3)
    U_iou_T = pad_w(U_iou, 3)
    W_f_T = pad_w(W_f, 1)
    U_f_T = pad_w(U_f, 1)
    b_iou_p = pad_b(b_iou, 3)
    b_f_p = pad_b(b_f, 1)

    # Stacked K=256 weight for the internal kernel: one MXU pass computes
    # [iou | xwf] from [x_parent | h_sum].  Fills MXU depth on v6e/v7x and is
    # compute-neutral on v5e.
    W_comb = np.zeros((2 * f_pad, 4 * f_pad), np.float32)
    W_comb[:f_pad, :3 * f_pad] = W_iou_T
    W_comb[:f_pad, 3 * f_pad:] = W_f_T
    W_comb[f_pad:, :3 * f_pad] = U_iou_T
    b_comb = np.concatenate([b_iou_p, b_f_p], axis=1)

    padded = dict(
        W_iou_T=jnp.asarray(W_iou_T, jnp.bfloat16),
        b_iou=jnp.asarray(b_iou_p, jnp.float32),
        W_comb_T=jnp.asarray(W_comb, jnp.bfloat16),
        b_comb=jnp.asarray(b_comb, jnp.float32),
        U_f_T=jnp.asarray(U_f_T, jnp.bfloat16),
    )
    return padded, raw


# ---------------------------------------------------------------------------
# Pure-JAX f32 reference (mirrors the PyTorch module exactly).
# ---------------------------------------------------------------------------
def tree_lstm_reference(raw, features, node_order, adjacency_list, edge_order):
    node_order = np.asarray(node_order)
    adjacency_list = np.asarray(adjacency_list)
    edge_order = np.asarray(edge_order)
    N, F = features.shape
    h = jnp.zeros((N, F), jnp.float32)
    c = jnp.zeros((N, F), jnp.float32)
    W_iou, b_iou, U_iou = raw["W_iou"], raw["b_iou"], raw["U_iou"]
    W_f, b_f, U_f = raw["W_f"], raw["b_f"], raw["U_f"]
    for n in range(int(node_order.max()) + 1):
        node_idx = np.where(node_order == n)[0]
        x = features[node_idx]
        if n == 0:
            iou = x @ W_iou.T + b_iou
        else:
            edge_idx = np.where(edge_order == n)[0]
            adj = adjacency_list[edge_idx]
            parent_idx, child_idx = adj[:, 0], adj[:, 1]
            child_h, child_c = h[child_idx], c[child_idx]
            seg = jnp.asarray(
                (parent_idx[None, :] == node_idx[:, None]).astype(np.float32))
            iou = x @ W_iou.T + b_iou + (seg @ child_h) @ U_iou.T
        i = jax.nn.sigmoid(iou[:, :F])
        o = jax.nn.sigmoid(iou[:, F:2 * F])
        u = jnp.tanh(iou[:, 2 * F:])
        if n == 0:
            c_new = i * u
        else:
            f = jax.nn.sigmoid(features[parent_idx] @ W_f.T + b_f
                               + child_h @ U_f.T)
            c_new = i * u + seg @ (f * child_c)
        h = h.at[node_idx].set(o * jnp.tanh(c_new))
        c = c.at[node_idx].set(c_new)
    return h


if __name__ == "__main__":
    F = 32  # in_features == out_features (hidden size)

    # Small complete binary tree with 7 nodes:
    #   node 0 = root (order 2), nodes 1,2 = internal (order 1),
    #   nodes 3..6 = leaves (order 0).  Edges are (parent, child).
    node_order = np.array([2, 1, 1, 0, 0, 0, 0], dtype=np.int32)
    adjacency_list = np.array(
        [[0, 1], [0, 2], [1, 3], [1, 4], [2, 5], [2, 6]], dtype=np.int32)
    edge_order = np.array([2, 2, 1, 1, 1, 1], dtype=np.int32)

    key = jax.random.PRNGKey(0)
    k_feat, k_par = jax.random.split(key)
    features = jax.random.normal(k_feat, (node_order.shape[0], F), jnp.float32)
    params, raw = init_params(k_par, F)

    h = tree_lstm_forward(params, features, node_order, adjacency_list,
                          edge_order)
    h = jax.block_until_ready(h)
    assert h.shape == (node_order.shape[0], F)
    assert bool(jnp.all(jnp.isfinite(h)))

    # Sanity check against a pure-JAX f32 reference of the PyTorch module
    # (kernel path uses bf16 matmul operands / bf16 child-c stream, hence the
    # loose tolerance).
    h_ref = tree_lstm_reference(raw, features, node_order, adjacency_list,
                                edge_order)
    err = float(jnp.max(jnp.abs(h - h_ref)))
    assert err < 5e-2, f"max abs err vs reference: {err}"
    print("KERNEL_OK")
</pallas_src>

<mosaic_0001>
module attributes {stable_mosaic.version = 11 : i64} {
  func.func @kernel(%arg0: i32, %arg1: memref<8x128xbf16, #tpu.memory_space<vmem>>, %arg2: memref<128x384xbf16, #tpu.memory_space<vmem>>, %arg3: memref<1x384xf32, #tpu.memory_space<vmem>>, %arg4: memref<8x128xbf16, #tpu.memory_space<vmem>>, %arg5: memref<8x128xf32, #tpu.memory_space<vmem>>) attributes {dimension_semantics = [#tpu.dimension_semantics<parallel>], iteration_bounds = array<i64: 1>, scalar_prefetch = 0 : i64, scratch_operands = 0 : i64, tpu.core_type = #tpu.core_type<tc>, window_params = [{transform_indices = @transform_0, window_bounds = array<i64: 8, 128>}, {pipeline_mode = #tpu.pipeline_mode<synchronous>, transform_indices = @transform_1, window_bounds = array<i64: 128, 384>}, {pipeline_mode = #tpu.pipeline_mode<synchronous>, transform_indices = @transform_2, window_bounds = array<i64: 1, 384>}, {transform_indices = @transform_3, window_bounds = array<i64: 8, 128>}, {transform_indices = @transform_4, window_bounds = array<i64: 8, 128>}]} {
    %c0 = arith.constant 0 : index
    %c0_0 = arith.constant 0 : index
    %0 = vector.load %arg1[%c0, %c0_0] : memref<8x128xbf16, #tpu.memory_space<vmem>>, vector<8x128xbf16>
    %c0_1 = arith.constant 0 : index
    %c0_2 = arith.constant 0 : index
    %1 = vector.load %arg2[%c0_1, %c0_2] : memref<128x384xbf16, #tpu.memory_space<vmem>>, vector<128x384xbf16>
    %cst = arith.constant dense<0.000000e+00> : vector<8x384xf32>
    %2 = tpu.matmul %0, %1, %cst {dimension_numbers = #tpu.dot_dimension_numbers<[1], [0], [0], [1], [0, 0, 1, 1], [], []>} : vector<8x128xbf16>, vector<128x384xbf16>, vector<8x384xf32> -> vector<8x384xf32>
    %c0_3 = arith.constant 0 : index
    %c0_4 = arith.constant 0 : index
    %3 = vector.load %arg3[%c0_3, %c0_4] : memref<1x384xf32, #tpu.memory_space<vmem>>, vector<1x384xf32>
    %4 = vector.broadcast %3 : vector<1x384xf32> to vector<8x384xf32>
    %5 = arith.addf %2, %4 : vector<8x384xf32>
    %6 = vector.extract_strided_slice %5 {offsets = [0, 0], sizes = [8, 128], strides = [1, 1]} : vector<8x384xf32> to vector<8x128xf32>
    %7 = arith.negf %6 : vector<8x128xf32>
    %8 = math.exp %7 : vector<8x128xf32>
    %cst_5 = arith.constant 1.000000e+00 : f32
    %9 = vector.broadcast %cst_5 : f32 to vector<8x128xf32>
    %10 = arith.addf %9, %8 : vector<8x128xf32>
    %11 = arith.divf %9, %10 : vector<8x128xf32>
    %12 = vector.extract_strided_slice %5 {offsets = [0, 128], sizes = [8, 128], strides = [1, 1]} : vector<8x384xf32> to vector<8x128xf32>
    %13 = arith.negf %12 : vector<8x128xf32>
    %14 = math.exp %13 : vector<8x128xf32>
    %cst_6 = arith.constant 1.000000e+00 : f32
    %15 = vector.broadcast %cst_6 : f32 to vector<8x128xf32>
    %16 = arith.addf %15, %14 : vector<8x128xf32>
    %17 = arith.divf %15, %16 : vector<8x128xf32>
    %18 = vector.extract_strided_slice %5 {offsets = [0, 256], sizes = [8, 128], strides = [1, 1]} : vector<8x384xf32> to vector<8x128xf32>
    %19 = math.tanh %18 : vector<8x128xf32>
    %20 = arith.mulf %11, %19 : vector<8x128xf32>
    %21 = math.tanh %20 : vector<8x128xf32>
    %22 = arith.mulf %17, %21 : vector<8x128xf32>
    %23 = arith.truncf %22 : vector<8x128xf32> to vector<8x128xbf16>
    %c0_7 = arith.constant 0 : index
    %c0_8 = arith.constant 0 : index
    %24 = vector.load %arg4[%c0_7, %c0_8] : memref<8x128xbf16, #tpu.memory_space<vmem>>, vector<8x128xbf16>
    tpu.vector_store %arg4[%c0_7, %c0_8], %23 {strides = array<i32>} : memref<8x128xbf16, #tpu.memory_space<vmem>>, vector<8x128xbf16>,
    %c0_9 = arith.constant 0 : index
    %c0_10 = arith.constant 0 : index
    %25 = vector.load %arg5[%c0_9, %c0_10] : memref<8x128xf32, #tpu.memory_space<vmem>>, vector<8x128xf32>
    tpu.vector_store %arg5[%c0_9, %c0_10], %20 {strides = array<i32>} : memref<8x128xf32, #tpu.memory_space<vmem>>, vector<8x128xf32>,
    return
  }
  func.func @transform_0(%arg0: i32) -> (i32, i32) {
    %c0_i32 = arith.constant 0 : i32
    %c0_i32_0 = arith.constant 0 : i32
    return %arg0, %c0_i32 : i32, i32
  }
  func.func @transform_1(%arg0: i32) -> (i32, i32) {
    %c0_i32 = arith.constant 0 : i32
    %c0_i32_0 = arith.constant 0 : i32
    %c0_i32_1 = arith.constant 0 : i32
    return %c0_i32, %c0_i32_0 : i32, i32
  }
  func.func @transform_2(%arg0: i32) -> (i32, i32) {
    %c0_i32 = arith.constant 0 : i32
    %c0_i32_0 = arith.constant 0 : i32
    %c0_i32_1 = arith.constant 0 : i32
    return %c0_i32, %c0_i32_0 : i32, i32
  }
  func.func @transform_3(%arg0: i32) -> (i32, i32) {
    %c0_i32 = arith.constant 0 : i32
    %c0_i32_0 = arith.constant 0 : i32
    return %arg0, %c0_i32 : i32, i32
  }
  func.func @transform_4(%arg0: i32) -> (i32, i32) {
    %c0_i32 = arith.constant 0 : i32
    %c0_i32_0 = arith.constant 0 : i32
    return %arg0, %c0_i32 : i32, i32
  }
}

</mosaic_0001>

<llo_original>
// kernel: _leaf_call.1
$region0: #{_leaf_call.1}
  #allocation0 [shape = 'u32[]', space=smem, size = 0x4, offset = 0x4, fixed_abs, tag = 'smem constant byte address 0x4 - core index']
  #allocation1 [shape = 'u32[144,128]{1,0:T(1,128)}', space=vmem, size = 0x12000, scoped, tag = 'internal scratch']
  %s0 = inlined_call_operand.hbm [shape: bf16[8,128], index: 0, kind: input, shape index: {}]
  %s1 = inlined_call_operand.hbm [shape: bf16[128,384], index: 1, kind: input, shape index: {}]
  %s2 = inlined_call_operand.vmem [shape: f32[1,384], index: 2, kind: input, shape index: {}]
  %s3 = inlined_call_operand.hbm [shape: bf16[8,128], index: 3, kind: output, shape index: {0}]
  %s4 = inlined_call_operand.hbm [shape: f32[8,128], index: 4, kind: output, shape index: {1}]
  %5 = xla_tuple %s3, %s4
  %s6 = sld [smem:[#allocation0]]
  $region38: #{_leaf_call.1} parent=0
    _
  %s8 = ssub.s32 1, %s6
  %s9 = scalar_select 0, %s8, %s6
  $region1: #{_leaf_call.1} parent=0
    #allocation2 [shape = 'u8[2048]{0}', space=vmem, size = 0x800, scoped, tag = 'input window, operand 0, single buffered']
    #allocation3 [shape = 's32[1]{0}', space=sflag, size = 0x4, scoped, tag = 'scoped memory for _leaf_call.1']
    #allocation4 [shape = 's32[1]{0}', space=sflag, size = 0x4, scoped, tag = 'scoped memory for _leaf_call.1']
    #allocation5 [shape = 'u8[98304]{0}', space=vmem, size = 0x18000, scoped, tag = 'input window, operand 1, single buffered']
    #allocation6 [shape = 's32[1]{0}', space=sflag, size = 0x4, scoped, tag = 'scoped memory for _leaf_call.1']
    #allocation7 [shape = 'u8[2048]{0}', space=vmem, size = 0x800, scoped, tag = 'output window, operand 0, single buffered']
    #allocation8 [shape = 'u8[4096]{0}', space=vmem, size = 0x1000, scoped, tag = 'output window, operand 1, single buffered']
    #allocation9 [shape = 's32[1]{0}', space=sflag, size = 0x4, scoped, tag = 'scoped memory for _leaf_call.1']
    %10 = vsyncpa [#allocation3], 0
    %11 = vsyncpa [#allocation6], 0
    %12 = vsyncpa [#allocation4], 0
    %13 = vsyncpa [#allocation9], 0
    // Predicated region
    $region2: #{_leaf_call.1} parent=1 // pred_check
      _
    $region3: #{_leaf_call.1} parent=1 // pred_check_branch
      %15 = sbr.rel (0) target = $region5
    $region4: #{_leaf_call.1} parent=1 // pred_region
      %s17 = ssub.s32 64, 64
      %18 = vsyncadd [#allocation3], %s17
      %s20 = sshll.u32 [#allocation2], 4
      %s21 = int_to_ptr.vmem [resolvable:$true] %s20
      %23 = dma.hbm_to_vmem [thread:$0]  %s0, 64, %s21, [#allocation3]
    $region5: #{_leaf_call.1} parent=1 // pred_fallthru
      _
    // Predicated region
    $region6: #{_leaf_call.1} parent=1 // pred_check
      _
    $region7: #{_leaf_call.1} parent=1 // pred_check_branch
      %25 = sbr.rel (0) target = $region9
    $region8: #{_leaf_call.1} parent=1 // pred_region
      %s27 = ssub.s32 3072, 3072
      %28 = vsyncadd [#allocation6], %s27
      %s29 = sshll.u32 [#allocation5], 4
      %s30 = int_to_ptr.vmem [resolvable:$true] %s29
      %35 = dma.hbm_to_vmem [thread:$0]  %s1, 3072, %s30, [#allocation6], 192, 192, 12
    $region9: #{_leaf_call.1} parent=1 // pred_fallthru
      _
    // Predicated region
    $region10: #{_leaf_call.1} parent=1 // pred_check
      _
    $region11: #{_leaf_call.1} parent=1 // pred_check_branch
      %37 = sbr.rel (0) target = $region13
    $region12: #{_leaf_call.1} parent=1 // pred_region
      _
    $region13: #{_leaf_call.1} parent=1 // pred_fallthru
      _
    // Predicated region
    $region14: #{_leaf_call.1} parent=1 // pred_check
      _
    $region15: #{_leaf_call.1} parent=1 // pred_check_branch
      %39 = sbr.rel (0) target = $region17
    $region16: #{_leaf_call.1} parent=1 // pred_region
      %40 = dma.done [#allocation3], 64
    $region17: #{_leaf_call.1} parent=1 // pred_fallthru
      _
    // Predicated region
    $region18: #{_leaf_call.1} parent=1 // pred_check
      _
    $region19: #{_leaf_call.1} parent=1 // pred_check_branch
      %42 = sbr.rel (0) target = $region21
    $region20: #{_leaf_call.1} parent=1 // pred_region
      %43 = dma.done [#allocation6], 3072
    $region21: #{_leaf_call.1} parent=1 // pred_fallthru
      _
    %v45 = vld [vmem:[#allocation2] sm:$0xf]
    %v46 = vld [vmem:[#allocation5] sm:$0xff]
    %v47 = vld [vmem:[#allocation5 + $0x8] sm:$0xf]
    %v48 = vld [vmem:[#allocation5 + $0xc] sm:$0xff]
    %v49 = vld [vmem:[#allocation5 + $0x14] sm:$0xf]
    %v50 = vld [vmem:[#allocation5 + $0x18] sm:$0xff]
    %v51 = vld [vmem:[#allocation5 + $0x20] sm:$0xf]
    %v52 = vld [vmem:[#allocation5 + $0x24] sm:$0xff]
    %v53 = vld [vmem:[#allocation5 + $0x2c] sm:$0xf]
    %v54 = vld [vmem:[#allocation5 + $0x30] sm:$0xff]
    %v55 = vld [vmem:[#allocation5 + $0x38] sm:$0xf]
    %v56 = vld [vmem:[#allocation5 + $0x3c] sm:$0xff]
    %v57 = vld [vmem:[#allocation5 + $0x44] sm:$0xf]
    %v58 = vld [vmem:[#allocation5 + $0x48] sm:$0xff]
    %v59 = vld [vmem:[#allocation5 + $0x50] sm:$0xf]
    %v60 = vld [vmem:[#allocation5 + $0x54] sm:$0xff]
    %v61 = vld [vmem:[#allocation5 + $0x5c] sm:$0xf]
    %v62 = vld [vmem:[#allocation5 + $0x60] sm:$0xff]
    %v63 = vld [vmem:[#allocation5 + $0x68] sm:$0xf]
    %v64 = vld [vmem:[#allocation5 + $0x6c] sm:$0xff]
    %v65 = vld [vmem:[#allocation5 + $0x74] sm:$0xf]
    %v66 = vld [vmem:[#allocation5 + $0x78] sm:$0xff]
    %v67 = vld [vmem:[#allocation5 + $0x80] sm:$0xf]
    %v68 = vld [vmem:[#allocation5 + $0x84] sm:$0xff]
    %v69 = vld [vmem:[#allocation5 + $0x8c] sm:$0xf]
    %v70 = vld [vmem:[#allocation5 + $0x90] sm:$0xff]
    %v71 = vld [vmem:[#allocation5 + $0x98] sm:$0xf]
    %v72 = vld [vmem:[#allocation5 + $0x9c] sm:$0xff]
    %v73 = vld [vmem:[#allocation5 + $0xa4] sm:$0xf]
    %v74 = vld [vmem:[#allocation5 + $0xa8] sm:$0xff]
    %v75 = vld [vmem:[#allocation5 + $0xb0] sm:$0xf]
    %v76 = vld [vmem:[#allocation5 + $0xb4] sm:$0xff]
    %v77 = vld [vmem:[#allocation5 + $0xbc] sm:$0xf]
    %v78 = vld [vmem:[%s2] sm:$0x7]
    %v80 = vlaneseq
    %v81 = vshrl.u32 %v80, 7
    %v82 = vsub.s32 0, %v81
    %v83 = vrot.slane %v78, %v82
    %v84 = vlaneseq
    %v85 = vshrl.u32 %v84, 7
    %v86 = vsub.s32 1, %v85
    %v87 = vrot.slane %v78, %v86
    %v88 = vlaneseq
    %v89 = vshrl.u32 %v88, 7
    %v90 = vsub.s32 2, %v89
    %v91 = vrot.slane %v78, %v90
    %v127 = vunpack.c.l.b16 %v46
    %v128 = vunpack.c.h.b16 %v46
    %v129 = vunpack.c.l.b16 %v47
    %v130 = vunpack.c.l.b16 %v48
    %v131 = vunpack.c.h.b16 %v48
    %v132 = vunpack.c.l.b16 %v49
    %v133 = vunpack.c.l.b16 %v50
    %v134 = vunpack.c.h.b16 %v50
    %v135 = vunpack.c.l.b16 %v51
    %v136 = vunpack.c.l.b16 %v52
    %v137 = vunpack.c.h.b16 %v52
    %v138 = vunpack.c.l.b16 %v53
    %v139 = vunpack.c.l.b16 %v54
    %v140 = vunpack.c.h.b16 %v54
    %v141 = vunpack.c.l.b16 %v55
    %v142 = vunpack.c.l.b16 %v56
    %v143 = vunpack.c.h.b16 %v56
    %v144 = vunpack.c.l.b16 %v57
    %v145 = vunpack.c.l.b16 %v58
    %v146 = vunpack.c.h.b16 %v58
    %v147 = vunpack.c.l.b16 %v59
    %v148 = vunpack.c.l.b16 %v60
    %v149 = vunpack.c.h.b16 %v60
    %v150 = vunpack.c.l.b16 %v61
    %v151 = vunpack.c.l.b16 %v62
    %v152 = vunpack.c.h.b16 %v62
    %v153 = vunpack.c.l.b16 %v63
    %v154 = vunpack.c.l.b16 %v64
    %v155 = vunpack.c.h.b16 %v64
    %v156 = vunpack.c.l.b16 %v65
    %v157 = vunpack.c.l.b16 %v66
    %v158 = vunpack.c.h.b16 %v66
    %v159 = vunpack.c.l.b16 %v67
    %v160 = vunpack.c.l.b16 %v68
    %v161 = vunpack.c.h.b16 %v68
    %v162 = vunpack.c.l.b16 %v69
    %v163 = vunpack.c.l.b16 %v70
    %v164 = vunpack.c.h.b16 %v70
    %v165 = vunpack.c.l.b16 %v71
    %v166 = vunpack.c.l.b16 %v72
    %v167 = vunpack.c.h.b16 %v72
    %v168 = vunpack.c.l.b16 %v73
    %v169 = vunpack.c.l.b16 %v74
    %v170 = vunpack.c.h.b16 %v74
    %v171 = vunpack.c.l.b16 %v75
    %v172 = vunpack.c.l.b16 %v76
    %v173 = vunpack.c.h.b16 %v76
    %v174 = vunpack.c.l.b16 %v77
    %v175 = vpack.c.b16 %v130, %v127
    %v176 = vpack.c.b16 %v131, %v128
    %v177 = vpack.c.b16 %v132, %v129
    %v178 = vpack.c.b16 %v136, %v133
    %v179 = vpack.c.b16 %v137, %v134
    %v180 = vpack.c.b16 %v138, %v135
    %v181 = vpack.c.b16 %v142, %v139
    %v182 = vpack.c.b16 %v143, %v140
    %v183 = vpack.c.b16 %v144, %v141
    %v184 = vpack.c.b16 %v148, %v145
    %v185 = vpack.c.b16 %v149, %v146
    %v186 = vpack.c.b16 %v150, %v147
    %v187 = vpack.c.b16 %v154, %v151
    %v188 = vpack.c.b16 %v155, %v152
    %v189 = vpack.c.b16 %v156, %v153
    %v190 = vpack.c.b16 %v160, %v157
    %v191 = vpack.c.b16 %v161, %v158
    %v192 = vpack.c.b16 %v162, %v159
    %v193 = vpack.c.b16 %v166, %v163
    %v194 = vpack.c.b16 %v167, %v164
    %v195 = vpack.c.b16 %v168, %v165
    %v196 = vpack.c.b16 %v172, %v169
    %v197 = vpack.c.b16 %v173, %v170
    %v198 = vpack.c.b16 %v174, %v171
    %223 = vmatprep.subr.bf16.mxu0 %v176
    %224 = vmatpush1.bf16.msra.mxu0 %v175
    %225 = vmatprep.subr.bf16.mxu0 %v179
    %226 = vmatpush1.bf16.msra.mxu0 %v178
    %227 = vmatprep.subr.bf16.mxu0 %v182
    %228 = vmatpush1.bf16.msra.mxu0 %v181
    %229 = vmatprep.subr.bf16.mxu0 %v185
    %230 = vmatpush1.bf16.msra.mxu0 %v184
    %231 = vmatprep.subr.bf16.mxu0 %v188
    %232 = vmatpush1.bf16.msra.mxu0 %v187
    %233 = vmatprep.subr.bf16.mxu0 %v191
    %234 = vmatpush1.bf16.msra.mxu0 %v190
    %235 = vmatprep.subr.bf16.mxu0 %v194
    %236 = vmatpush1.bf16.msra.mxu0 %v193
    %237 = vmatprep.subr.bf16.mxu0 %v197
    %238 = vmatpush1.bf16.msra.mxu0 %v196
    %239 = vmatprep.subr.bf16.mxu0 0
    %240 = vmatpush1.bf16.msra.mxu0 0
    %241 = vmatprep.subr.bf16.mxu0 0
    %242 = vmatpush1.bf16.msra.mxu0 0
    %243 = vmatprep.subr.bf16.mxu0 0
    %244 = vmatpush1.bf16.msra.mxu0 0
    %245 = vmatprep.subr.bf16.mxu0 0
    %246 = vmatpush1.bf16.msra.mxu0 0
    %247 = vmatprep.subr.bf16.mxu0 0
    %248 = vmatpush1.bf16.msra.mxu0 0
    %249 = vmatprep.subr.bf16.mxu0 0
    %250 = vmatpush1.bf16.msra.mxu0 0
    %251 = vmatprep.subr.bf16.mxu0 0
    %252 = vmatpush1.bf16.msra.mxu0 0
    %253 = vmatprep.subr.bf16.mxu0 0
    %254 = vmatpush1.bf16.msra.mxu0 0
    %255 = vmatprep.mubr.bf16.mxu0 0
    %256 = vmatmul.mubr.bf16.gmra.mrb[0].mxu0 %v45
    %v257 = vpop.f32.mrb[0].mxu0
    %v258 = vadd.f32 %v83, %v257
    %v259 = vpop.f32.mrb[0].mxu0
    %v260 = vadd.f32 %v87, %v259
    %v261 = vpop.f32.mrb[0].mxu0
    %v262 = vpop.f32.mrb[0].mxu0
    %263 = vdwg.mxu0
    %264 = vmatprep.subr.bf16.mxu0 0
    %265 = vmatpush1.bf16.msra.mxu0 %v177
    %266 = vmatprep.subr.bf16.mxu0 0
    %267 = vmatpush1.bf16.msra.mxu0 %v180
    %268 = vmatprep.subr.bf16.mxu0 0
    %269 = vmatpush1.bf16.msra.mxu0 %v183
    %270 = vmatprep.subr.bf16.mxu0 0
    %271 = vmatpush1.bf16.msra.mxu0 %v186
    %272 = vmatprep.subr.bf16.mxu0 0
    %273 = vmatpush1.bf16.msra.mxu0 %v189
    %274 = vmatprep.subr.bf16.mxu0 0
    %275 = vmatpush1.bf16.msra.mxu0 %v192
    %276 = vmatprep.subr.bf16.mxu0 0
    %277 = vmatpush1.bf16.msra.mxu0 %v195
    %278 = vmatprep.subr.bf16.mxu0 0
    %279 = vmatpush1.bf16.msra.mxu0 %v198
    %280 = vmatprep.subr.bf16.mxu0 0
    %281 = vmatpush1.bf16.msra.mxu0 0
    %282 = vmatprep.subr.bf16.mxu0 0
    %283 = vmatpush1.bf16.msra.mxu0 0
    %284 = vmatprep.subr.bf16.mxu0 0
    %285 = vmatpush1.bf16.msra.mxu0 0
    %286 = vmatprep.subr.bf16.mxu0 0
    %287 = vmatpush1.bf16.msra.mxu0 0
    %288 = vmatprep.subr.bf16.mxu0 0
    %289 = vmatpush1.bf16.msra.mxu0 0
    %290 = vmatprep.subr.bf16.mxu0 0
    %291 = vmatpush1.bf16.msra.mxu0 0
    %292 = vmatprep.subr.bf16.mxu0 0
    %293 = vmatpush1.bf16.msra.mxu0 0
    %294 = vmatprep.subr.bf16.mxu0 0
    %295 = vmatpush1.bf16.msra.mxu0 0
    %296 = vmatprep.mubr.bf16.mxu0 0
    %297 = vmatmul.mubr.bf16.gmra.mrb[0].mxu0 %v45
    %v298 = vpop.f32.mrb[0].mxu0
    %v299 = vadd.f32 %v91, %v298
    %v300 = vpop.f32.mrb[0].mxu0
    %v301 = vpop.f32.mrb[0].mxu0
    %v302 = vpop.f32.mrb[0].mxu0
    %303 = vdwg.mxu0
    %v304 = vxor.u32 %v258, 2147483648
    %v305 = vmul.f32 %v304, 1.442695
    %v306 = vpow.pop %v305
    %v307 = vadd.f32 %v306, 1.0
    %v308 = vrcp.pop %v307
    %v309 = vmul.f32 1.0, %v308
    %v310 = vxor.u32 %v260, 2147483648
    %v311 = vmul.f32 %v310, 1.442695
    %v312 = vpow.pop %v311
    %v313 = vadd.f32 %v312, 1.0
    %v314 = vrcp.pop %v313
    %v315 = vmul.f32 1.0, %v314
    %v316 = vtanh.pop %v299
    %v317 = vmul.f32 %v309, %v316
    %v318 = vtanh.pop %v317
    %v319 = vmul.f32 %v315, %v318
    %v320 = vpack.c.bf16 %v319, %v319
    %321 = vst [vmem:[#allocation7] sm:$0xf] %v320
    %322 = vst [vmem:[#allocation8] sm:$0xff] %v317
    // Predicated region
    $region22: #{_leaf_call.1} parent=1 // pred_check
      _
    $region23: #{_leaf_call.1} parent=1 // pred_check_branch
      %324 = sbr.rel (0) target = $region25
    $region24: #{_leaf_call.1} parent=1 // pred_region
      %s326 = ssub.s32 64, 64
      %327 = vsyncadd [#allocation4], %s326
      %s329 = sshll.u32 [#allocation7], 4
      %s330 = int_to_ptr.vmem [resolvable:$true] %s329
      %332 = dma.vmem_to_hbm [thread:$0]  %s330, 64, %s3, [#allocation4]
    $region25: #{_leaf_call.1} parent=1 // pred_fallthru
      _
    // Predicated region
    $region26: #{_leaf_call.1} parent=1 // pred_check
      _
    $region27: #{_leaf_call.1} parent=1 // pred_check_branch
      %334 = sbr.rel (0) target = $region29
    $region28: #{_leaf_call.1} parent=1 // pred_region
      %s336 = ssub.s32 128, 128
      %337 = vsyncadd [#allocation9], %s336
      %s339 = sshll.u32 [#allocation8], 4
      %s340 = int_to_ptr.vmem [resolvable:$true] %s339
      %342 = dma.vmem_to_hbm [thread:$0]  %s340, 128, %s4, [#allocation9]
    $region29: #{_leaf_call.1} parent=1 // pred_fallthru
      _
    // Predicated region
    $region30: #{_leaf_call.1} parent=1 // pred_check
      _
    $region31: #{_leaf_call.1} parent=1 // pred_check_branch
      %344 = sbr.rel (0) target = $region33
    $region32: #{_leaf_call.1} parent=1 // pred_region
      %345 = dma.done [#allocation4], 64
    $region33: #{_leaf_call.1} parent=1 // pred_fallthru
      _
    // Predicated region
    $region34: #{_leaf_call.1} parent=1 // pred_check
      _
    $region35: #{_leaf_call.1} parent=1 // pred_check_branch
      %347 = sbr.rel (0) target = $region37
    $region36: #{_leaf_call.1} parent=1 // pred_region
      %348 = dma.done [#allocation9], 128
    $region37: #{_leaf_call.1} parent=1 // pred_fallthru
      _
    %349 = vsyncpa [#allocation3], 1
    %350 = vsyncpa [#allocation6], 1
    %351 = vsyncpa [#allocation4], 1
    %352 = vsyncpa [#allocation9], 1

</llo_original>
